<compile_context>
chip_gen: v6e
topology: v6e:2x2x1
jax: 0.10.0
libtpu: 0.0.40
codegen_flags: <defaults>
</compile_context>

<pallas_src>
import jax
import jax.numpy as jnp
from jax.experimental import pallas as pl
from jax.experimental.pallas import tpu as pltpu

BN_EPS = 1e-5
LANE = 128      # TPU lane width (fast minor axis)
SUBLANE = 8     # f32 sublane count


def _round_up(n, m):
    return ((n + m - 1) // m) * m


def _bn_train_folded(h, gamma, beta, row_mask, inv_n):
    """Train-mode BatchNorm1d folded into a single scale/shift.

    One pass over h gathers sum and sum-of-squares (biased variance).  Rows that
    are batch padding (row_mask False) are excluded from the statistics; inv_n is
    1 / (number of real rows).
    """
    hm = h if row_mask is None else jnp.where(row_mask, h, 0.0)
    s1 = jnp.sum(hm, axis=0, keepdims=True)          # XLU cross-sublane reduce
    s2 = jnp.sum(hm * hm, axis=0, keepdims=True)
    mean = s1 * inv_n
    var = jnp.maximum(s2 * inv_n - mean * mean, 0.0)
    scale = gamma * jax.lax.rsqrt(var + BN_EPS)       # rsqrt -> EUP slot (free)
    shift = beta - mean * scale
    return h * scale + shift


def _make_generator_kernel(n_layers, n_valid_rows, batch_padded):
    """Builds the fused kernel for a static layer count / batch size."""
    inv_n = 1.0 / float(n_valid_rows)
    need_mask = n_valid_rows != batch_padded

    def kernel(*refs):
        x_ref = refs[0]
        o_ref = refs[-1]
        p_refs = refs[1:-1]               # (W, gamma, beta) triples, pre-padded

        # Row mask for BN statistics: built once, reused by every layer.
        if need_mask:
            row_ids = jax.lax.broadcasted_iota(jnp.int32, (batch_padded, 1), 0)
            row_mask = row_ids < n_valid_rows
        else:
            row_mask = None

        t = x_ref[...]
        for li in range(n_layers):
            w = p_refs[3 * li][...]
            g = p_refs[3 * li + 1][...]
            b = p_refs[3 * li + 2][...]
            h = jnp.dot(t, w, preferred_element_type=jnp.float32)   # MXU
            h = _bn_train_folded(h, g, b, row_mask, inv_n)
            if li == n_layers - 1:
                act = jnp.tanh(h)                                   # last layer: Tanh
            else:
                act = jnp.maximum(h, 0.0)                           # ReLU
            t = act if li == 0 else act + t                         # residual for layers > 0
        o_ref[...] = t                                              # lane-dense unmasked store

    return kernel


def generator_forward(x, params):
    """Fused forward of the medGAN generator (train-mode BatchNorm semantics).

    x:      (B, randomDim) float32
    params: list of (W_t, gamma, beta); W_t shaped (in, out), gamma/beta (1, out).
    Returns (B, out_dim) float32 matching the PyTorch train-mode forward.
    """
    B, d_in = x.shape
    n_layers = len(params)
    d_out = params[-1][0].shape[1]

    Bp = _round_up(B, SUBLANE)
    din_p = _round_up(d_in, LANE)

    # Zero-pad input; padded rows are excluded from BN stats inside the kernel.
    x_p = jnp.zeros((Bp, din_p), jnp.float32).at[:B, :d_in].set(x)

    # Zero-pad weights / affine params to lane-dense shapes.
    flat_args = [x_p]
    cur_in_p = din_p
    last_out_p = None
    for (w, g, b) in params:
        din, dout = w.shape
        dout_p = _round_up(dout, LANE)
        w_p = jnp.zeros((cur_in_p, dout_p), jnp.float32).at[:din, :dout].set(w)
        g_p = jnp.zeros((1, dout_p), jnp.float32).at[:, :dout].set(g)
        b_p = jnp.zeros((1, dout_p), jnp.float32).at[:, :dout].set(b)
        flat_args += [w_p, g_p, b_p]
        cur_in_p = dout_p
        last_out_p = dout_p

    vmem = pl.BlockSpec(memory_space=pltpu.MemorySpace.VMEM)
    kernel = _make_generator_kernel(n_layers, B, Bp)

    out_p = pl.pallas_call(
        kernel,
        out_shape=jax.ShapeDtypeStruct((Bp, last_out_p), jnp.float32),
        in_specs=[vmem] * len(flat_args),
        out_specs=vmem,
    )(*flat_args)

    return out_p[:B, :d_out]


def _reference_forward(x, params):
    """Pure-JAX reference mirroring the PyTorch train-mode forward."""
    def bn(h, g, b):
        mean = jnp.mean(h, axis=0, keepdims=True)
        var = jnp.mean((h - mean) ** 2, axis=0, keepdims=True)
        return (h - mean) * jax.lax.rsqrt(var + BN_EPS) * g + b

    w0, g0, b0 = params[0]
    t = jnp.maximum(bn(x @ w0, g0, b0), 0.0)
    for (w, g, b) in params[1:-1]:
        t = jnp.maximum(bn(t @ w, g, b), 0.0) + t
    w, g, b = params[-1]
    return jnp.tanh(bn(t @ w, g, b)) + t


if __name__ == "__main__":
    # Small shapes consistent with the module: randomDim=32, generatorDims=(32, 32, 32)
    # (equal dims so the residual adds are valid, as in medGAN).  B=60 deliberately
    # not a multiple of 8 to exercise batch padding + masked BN statistics.
    B = 60
    random_dim = 32
    generator_dims = (32, 32, 32)

    key = jax.random.PRNGKey(0)
    keys = jax.random.split(key, 1 + 2 * len(generator_dims))

    x = jax.random.normal(keys[0], (B, random_dim), dtype=jnp.float32)

    params = []
    temp_dim = random_dim
    for i, gen_dim in enumerate(generator_dims):
        # nn.Linear weight is (out, in); stored pre-transposed as (in, out).
        bound = float(temp_dim) ** -0.5
        w_t = jax.random.uniform(
            keys[1 + 2 * i], (temp_dim, gen_dim),
            minval=-bound, maxval=bound, dtype=jnp.float32)
        # BatchNorm1d init (weight=1, bias=0), perturbed so the affine params
        # actually participate in the check.
        gamma = 1.0 + 0.05 * jax.random.normal(
            keys[2 + 2 * i], (1, gen_dim), dtype=jnp.float32)
        beta = 0.01 * jnp.arange(gen_dim, dtype=jnp.float32)[None, :]
        params.append((w_t, gamma, beta))
        temp_dim = gen_dim

    out = generator_forward(x, params)
    out = jax.block_until_ready(out)

    ref = _reference_forward(x, params)
    assert out.shape == (B, generator_dims[-1])
    assert jnp.allclose(out, ref, atol=3e-5, rtol=3e-5), "mismatch vs reference"

    print("KERNEL_OK")
</pallas_src>

<mosaic_0001>
module attributes {stable_mosaic.version = 11 : i64} {
  func.func @kernel(%arg0: memref<64x128xf32, #tpu.memory_space<vmem>>, %arg1: memref<128x128xf32, #tpu.memory_space<vmem>>, %arg2: memref<1x128xf32, #tpu.memory_space<vmem>>, %arg3: memref<1x128xf32, #tpu.memory_space<vmem>>, %arg4: memref<128x128xf32, #tpu.memory_space<vmem>>, %arg5: memref<1x128xf32, #tpu.memory_space<vmem>>, %arg6: memref<1x128xf32, #tpu.memory_space<vmem>>, %arg7: memref<128x128xf32, #tpu.memory_space<vmem>>, %arg8: memref<1x128xf32, #tpu.memory_space<vmem>>, %arg9: memref<1x128xf32, #tpu.memory_space<vmem>>, %arg10: memref<64x128xf32, #tpu.memory_space<vmem>>) attributes {dimension_semantics = [], scalar_prefetch = 0 : i64, scratch_operands = 0 : i64, tpu.core_type = #tpu.core_type<tc>} {
    %0 = tpu.iota {dimensions = array<i32: 0>} : vector<64x1xi32>
    %c60_i32 = arith.constant 60 : i32
    %1 = vector.broadcast %c60_i32 : i32 to vector<64x1xi32>
    %2 = arith.cmpi slt, %0, %1 : vector<64x1xi32>
    %c0 = arith.constant 0 : index
    %c0_0 = arith.constant 0 : index
    %3 = vector.load %arg0[%c0, %c0_0] : memref<64x128xf32, #tpu.memory_space<vmem>>, vector<64x128xf32>
    %c0_1 = arith.constant 0 : index
    %c0_2 = arith.constant 0 : index
    %4 = vector.load %arg1[%c0_1, %c0_2] : memref<128x128xf32, #tpu.memory_space<vmem>>, vector<128x128xf32>
    %c0_3 = arith.constant 0 : index
    %c0_4 = arith.constant 0 : index
    %5 = vector.load %arg2[%c0_3, %c0_4] : memref<1x128xf32, #tpu.memory_space<vmem>>, vector<1x128xf32>
    %c0_5 = arith.constant 0 : index
    %c0_6 = arith.constant 0 : index
    %6 = vector.load %arg3[%c0_5, %c0_6] : memref<1x128xf32, #tpu.memory_space<vmem>>, vector<1x128xf32>
    %cst = arith.constant dense<0.000000e+00> : vector<64x128xf32>
    %7 = tpu.matmul %3, %4, %cst {dimension_numbers = #tpu.dot_dimension_numbers<[1], [0], [0], [1], [0, 0, 1, 1], [], []>} : vector<64x128xf32>, vector<128x128xf32>, vector<64x128xf32> -> vector<64x128xf32>
    %cst_7 = arith.constant 0.000000e+00 : f32
    %8 = vector.shape_cast %2 : vector<64x1xi1> to vector<64x1xi1>
    %9 = vector.broadcast %8 : vector<64x1xi1> to vector<64x128xi1>
    %10 = vector.broadcast %cst_7 : f32 to vector<64x128xf32>
    %11 = arith.select %9, %7, %10 : vector<64x128xi1>, vector<64x128xf32>
    %cst_8 = arith.constant dense<0.000000e+00> : vector<128xf32>
    %12 = vector.multi_reduction <add>, %11, %cst_8 [0] : vector<64x128xf32> to vector<128xf32>
    %13 = vector.shape_cast %12 : vector<128xf32> to vector<1x128xf32>
    %14 = arith.mulf %11, %11 : vector<64x128xf32>
    %cst_9 = arith.constant dense<0.000000e+00> : vector<128xf32>
    %15 = vector.multi_reduction <add>, %14, %cst_9 [0] : vector<64x128xf32> to vector<128xf32>
    %16 = vector.shape_cast %15 : vector<128xf32> to vector<1x128xf32>
    %cst_10 = arith.constant 0.0166666675 : f32
    %17 = vector.broadcast %cst_10 : f32 to vector<1x128xf32>
    %18 = arith.mulf %13, %17 : vector<1x128xf32>
    %cst_11 = arith.constant 0.0166666675 : f32
    %19 = vector.broadcast %cst_11 : f32 to vector<1x128xf32>
    %20 = arith.mulf %16, %19 : vector<1x128xf32>
    %21 = arith.mulf %18, %18 : vector<1x128xf32>
    %22 = arith.subf %20, %21 : vector<1x128xf32>
    %cst_12 = arith.constant 0.000000e+00 : f32
    %23 = vector.broadcast %cst_12 : f32 to vector<1x128xf32>
    %24 = arith.maximumf %22, %23 : vector<1x128xf32>
    %cst_13 = arith.constant 9.99999974E-6 : f32
    %25 = vector.broadcast %cst_13 : f32 to vector<1x128xf32>
    %26 = arith.addf %24, %25 : vector<1x128xf32>
    %27 = math.rsqrt %26 : vector<1x128xf32>
    %28 = arith.mulf %5, %27 : vector<1x128xf32>
    %29 = arith.mulf %18, %28 : vector<1x128xf32>
    %30 = arith.subf %6, %29 : vector<1x128xf32>
    %31 = vector.broadcast %28 : vector<1x128xf32> to vector<64x128xf32>
    %32 = arith.mulf %7, %31 : vector<64x128xf32>
    %33 = vector.broadcast %30 : vector<1x128xf32> to vector<64x128xf32>
    %34 = arith.addf %32, %33 : vector<64x128xf32>
    %cst_14 = arith.constant 0.000000e+00 : f32
    %35 = vector.broadcast %cst_14 : f32 to vector<64x128xf32>
    %36 = arith.maximumf %34, %35 : vector<64x128xf32>
    %c0_15 = arith.constant 0 : index
    %c0_16 = arith.constant 0 : index
    %37 = vector.load %arg4[%c0_15, %c0_16] : memref<128x128xf32, #tpu.memory_space<vmem>>, vector<128x128xf32>
    %c0_17 = arith.constant 0 : index
    %c0_18 = arith.constant 0 : index
    %38 = vector.load %arg5[%c0_17, %c0_18] : memref<1x128xf32, #tpu.memory_space<vmem>>, vector<1x128xf32>
    %c0_19 = arith.constant 0 : index
    %c0_20 = arith.constant 0 : index
    %39 = vector.load %arg6[%c0_19, %c0_20] : memref<1x128xf32, #tpu.memory_space<vmem>>, vector<1x128xf32>
    %cst_21 = arith.constant dense<0.000000e+00> : vector<64x128xf32>
    %40 = tpu.matmul %36, %37, %cst_21 {dimension_numbers = #tpu.dot_dimension_numbers<[1], [0], [0], [1], [0, 0, 1, 1], [], []>} : vector<64x128xf32>, vector<128x128xf32>, vector<64x128xf32> -> vector<64x128xf32>
    %cst_22 = arith.constant 0.000000e+00 : f32
    %41 = vector.shape_cast %2 : vector<64x1xi1> to vector<64x1xi1>
    %42 = vector.broadcast %41 : vector<64x1xi1> to vector<64x128xi1>
    %43 = vector.broadcast %cst_22 : f32 to vector<64x128xf32>
    %44 = arith.select %42, %40, %43 : vector<64x128xi1>, vector<64x128xf32>
    %cst_23 = arith.constant dense<0.000000e+00> : vector<128xf32>
    %45 = vector.multi_reduction <add>, %44, %cst_23 [0] : vector<64x128xf32> to vector<128xf32>
    %46 = vector.shape_cast %45 : vector<128xf32> to vector<1x128xf32>
    %47 = arith.mulf %44, %44 : vector<64x128xf32>
    %cst_24 = arith.constant dense<0.000000e+00> : vector<128xf32>
    %48 = vector.multi_reduction <add>, %47, %cst_24 [0] : vector<64x128xf32> to vector<128xf32>
    %49 = vector.shape_cast %48 : vector<128xf32> to vector<1x128xf32>
    %cst_25 = arith.constant 0.0166666675 : f32
    %50 = vector.broadcast %cst_25 : f32 to vector<1x128xf32>
    %51 = arith.mulf %46, %50 : vector<1x128xf32>
    %cst_26 = arith.constant 0.0166666675 : f32
    %52 = vector.broadcast %cst_26 : f32 to vector<1x128xf32>
    %53 = arith.mulf %49, %52 : vector<1x128xf32>
    %54 = arith.mulf %51, %51 : vector<1x128xf32>
    %55 = arith.subf %53, %54 : vector<1x128xf32>
    %cst_27 = arith.constant 0.000000e+00 : f32
    %56 = vector.broadcast %cst_27 : f32 to vector<1x128xf32>
    %57 = arith.maximumf %55, %56 : vector<1x128xf32>
    %cst_28 = arith.constant 9.99999974E-6 : f32
    %58 = vector.broadcast %cst_28 : f32 to vector<1x128xf32>
    %59 = arith.addf %57, %58 : vector<1x128xf32>
    %60 = math.rsqrt %59 : vector<1x128xf32>
    %61 = arith.mulf %38, %60 : vector<1x128xf32>
    %62 = arith.mulf %51, %61 : vector<1x128xf32>
    %63 = arith.subf %39, %62 : vector<1x128xf32>
    %64 = vector.broadcast %61 : vector<1x128xf32> to vector<64x128xf32>
    %65 = arith.mulf %40, %64 : vector<64x128xf32>
    %66 = vector.broadcast %63 : vector<1x128xf32> to vector<64x128xf32>
    %67 = arith.addf %65, %66 : vector<64x128xf32>
    %cst_29 = arith.constant 0.000000e+00 : f32
    %68 = vector.broadcast %cst_29 : f32 to vector<64x128xf32>
    %69 = arith.maximumf %67, %68 : vector<64x128xf32>
    %70 = arith.addf %69, %36 : vector<64x128xf32>
    %c0_30 = arith.constant 0 : index
    %c0_31 = arith.constant 0 : index
    %71 = vector.load %arg7[%c0_30, %c0_31] : memref<128x128xf32, #tpu.memory_space<vmem>>, vector<128x128xf32>
    %c0_32 = arith.constant 0 : index
    %c0_33 = arith.constant 0 : index
    %72 = vector.load %arg8[%c0_32, %c0_33] : memref<1x128xf32, #tpu.memory_space<vmem>>, vector<1x128xf32>
    %c0_34 = arith.constant 0 : index
    %c0_35 = arith.constant 0 : index
    %73 = vector.load %arg9[%c0_34, %c0_35] : memref<1x128xf32, #tpu.memory_space<vmem>>, vector<1x128xf32>
    %cst_36 = arith.constant dense<0.000000e+00> : vector<64x128xf32>
    %74 = tpu.matmul %70, %71, %cst_36 {dimension_numbers = #tpu.dot_dimension_numbers<[1], [0], [0], [1], [0, 0, 1, 1], [], []>} : vector<64x128xf32>, vector<128x128xf32>, vector<64x128xf32> -> vector<64x128xf32>
    %cst_37 = arith.constant 0.000000e+00 : f32
    %75 = vector.shape_cast %2 : vector<64x1xi1> to vector<64x1xi1>
    %76 = vector.broadcast %75 : vector<64x1xi1> to vector<64x128xi1>
    %77 = vector.broadcast %cst_37 : f32 to vector<64x128xf32>
    %78 = arith.select %76, %74, %77 : vector<64x128xi1>, vector<64x128xf32>
    %cst_38 = arith.constant dense<0.000000e+00> : vector<128xf32>
    %79 = vector.multi_reduction <add>, %78, %cst_38 [0] : vector<64x128xf32> to vector<128xf32>
    %80 = vector.shape_cast %79 : vector<128xf32> to vector<1x128xf32>
    %81 = arith.mulf %78, %78 : vector<64x128xf32>
    %cst_39 = arith.constant dense<0.000000e+00> : vector<128xf32>
    %82 = vector.multi_reduction <add>, %81, %cst_39 [0] : vector<64x128xf32> to vector<128xf32>
    %83 = vector.shape_cast %82 : vector<128xf32> to vector<1x128xf32>
    %cst_40 = arith.constant 0.0166666675 : f32
    %84 = vector.broadcast %cst_40 : f32 to vector<1x128xf32>
    %85 = arith.mulf %80, %84 : vector<1x128xf32>
    %cst_41 = arith.constant 0.0166666675 : f32
    %86 = vector.broadcast %cst_41 : f32 to vector<1x128xf32>
    %87 = arith.mulf %83, %86 : vector<1x128xf32>
    %88 = arith.mulf %85, %85 : vector<1x128xf32>
    %89 = arith.subf %87, %88 : vector<1x128xf32>
    %cst_42 = arith.constant 0.000000e+00 : f32
    %90 = vector.broadcast %cst_42 : f32 to vector<1x128xf32>
    %91 = arith.maximumf %89, %90 : vector<1x128xf32>
    %cst_43 = arith.constant 9.99999974E-6 : f32
    %92 = vector.broadcast %cst_43 : f32 to vector<1x128xf32>
    %93 = arith.addf %91, %92 : vector<1x128xf32>
    %94 = math.rsqrt %93 : vector<1x128xf32>
    %95 = arith.mulf %72, %94 : vector<1x128xf32>
    %96 = arith.mulf %85, %95 : vector<1x128xf32>
    %97 = arith.subf %73, %96 : vector<1x128xf32>
    %98 = vector.broadcast %95 : vector<1x128xf32> to vector<64x128xf32>
    %99 = arith.mulf %74, %98 : vector<64x128xf32>
    %100 = vector.broadcast %97 : vector<1x128xf32> to vector<64x128xf32>
    %101 = arith.addf %99, %100 : vector<64x128xf32>
    %102 = math.tanh %101 : vector<64x128xf32>
    %103 = arith.addf %102, %70 : vector<64x128xf32>
    %c0_44 = arith.constant 0 : index
    %c0_45 = arith.constant 0 : index
    %104 = vector.load %arg10[%c0_44, %c0_45] : memref<64x128xf32, #tpu.memory_space<vmem>>, vector<64x128xf32>
    tpu.vector_store %arg10[%c0_44, %c0_45], %103 {strides = array<i32>} : memref<64x128xf32, #tpu.memory_space<vmem>>, vector<64x128xf32>,
    return
  }
}

</mosaic_0001>

<llo_original>
// kernel: tpu_custom_call.1
$region0: #{tpu_custom_call.1}
  #allocation0 [shape = 'u32[]', space=smem, size = 0x4, offset = 0x4, fixed_abs, tag = 'smem constant byte address 0x4 - core index']
  #allocation1 [shape = 'u32[144,128]{1,0:T(1,128)}', space=vmem, size = 0x12000, scoped, tag = 'internal scratch']
  %s0 = inlined_call_operand.hbm [shape: f32[64,128], index: 0, kind: input, shape index: {}]
  %s1 = inlined_call_operand.hbm [shape: f32[128,128], index: 1, kind: input, shape index: {}]
  %s2 = inlined_call_operand.vmem [shape: f32[1,128], index: 2, kind: input, shape index: {}]
  %s3 = inlined_call_operand.vmem [shape: f32[1,128], index: 3, kind: input, shape index: {}]
  %s4 = inlined_call_operand.hbm [shape: f32[128,128], index: 4, kind: input, shape index: {}]
  %s5 = inlined_call_operand.vmem [shape: f32[1,128], index: 5, kind: input, shape index: {}]
  %s6 = inlined_call_operand.vmem [shape: f32[1,128], index: 6, kind: input, shape index: {}]
  %s7 = inlined_call_operand.hbm [shape: f32[128,128], index: 7, kind: input, shape index: {}]
  %s8 = inlined_call_operand.vmem [shape: f32[1,128], index: 8, kind: input, shape index: {}]
  %s9 = inlined_call_operand.vmem [shape: f32[1,128], index: 9, kind: input, shape index: {}]
  %s10 = inlined_call_operand.hbm [shape: f32[64,128], index: 10, kind: output, shape index: {}]
  %s11 = sld [smem:[#allocation0]]
  $region66: #{tpu_custom_call.1} parent=0
    _
  %s13 = ssub.s32 1, %s11
  %s14 = scalar_select 0, %s13, %s11
  $region1: #{tpu_custom_call.1} parent=0
    #allocation2 [shape = 'u8[32768]{0}', space=vmem, size = 0x8000, scoped, tag = 'input window, operand 0, single buffered']
    #allocation3 [shape = 's32[1]{0}', space=sflag, size = 0x4, scoped, tag = 'scoped memory for tpu_custom_call.1']
    #allocation4 [shape = 's32[1]{0}', space=sflag, size = 0x4, scoped, tag = 'scoped memory for tpu_custom_call.1']
    #allocation5 [shape = 'u8[65536]{0}', space=vmem, size = 0x10000, scoped, tag = 'input window, operand 1, single buffered']
    #allocation6 [shape = 's32[1]{0}', space=sflag, size = 0x4, scoped, tag = 'scoped memory for tpu_custom_call.1']
    #allocation7 [shape = 'u8[65536]{0}', space=vmem, size = 0x10000, scoped, tag = 'input window, operand 4, single buffered']
    #allocation8 [shape = 'u8[65536]{0}', space=vmem, size = 0x10000, scoped, tag = 'input window, operand 7, single buffered']
    #allocation9 [shape = 's32[1]{0}', space=sflag, size = 0x4, scoped, tag = 'scoped memory for tpu_custom_call.1']
    #allocation10 [shape = 'u8[32768]{0}', space=vmem, size = 0x8000, scoped, tag = 'output window, operand 0, single buffered']
    %15 = vsyncpa [#allocation3], 0
    %16 = vsyncpa [#allocation6], 0
    %17 = vsyncpa [#allocation9], 0
    %18 = vsyncpa [#allocation4], 0
    // Predicated region
    $region2: #{tpu_custom_call.1} parent=1 // pred_check
      _
    $region3: #{tpu_custom_call.1} parent=1 // pred_check_branch
      %20 = sbr.rel (0) target = $region5
    $region4: #{tpu_custom_call.1} parent=1 // pred_region
      %s22 = ssub.s32 1024, 1024
      %23 = vsyncadd [#allocation3], %s22
      %s24 = sshll.u32 [#allocation2], 4
      %s25 = int_to_ptr.vmem [resolvable:$true] %s24
      %30 = dma.hbm_to_vmem [thread:$0]  %s0, 1024, %s25, [#allocation3], 128, 128, 8
    $region5: #{tpu_custom_call.1} parent=1 // pred_fallthru
      _
    // Predicated region
    $region6: #{tpu_custom_call.1} parent=1 // pred_check
      _
    $region7: #{tpu_custom_call.1} parent=1 // pred_check_branch
      %32 = sbr.rel (0) target = $region9
    $region8: #{tpu_custom_call.1} parent=1 // pred_region
      %s34 = ssub.s32 2048, 2048
      %35 = vsyncadd [#allocation6], %s34
      %s36 = sshll.u32 [#allocation5], 4
      %s37 = int_to_ptr.vmem [resolvable:$true] %s36
      %42 = dma.hbm_to_vmem [thread:$0]  %s1, 2048, %s37, [#allocation6], 128, 128, 8
    $region9: #{tpu_custom_call.1} parent=1 // pred_fallthru
      _
    // Predicated region
    $region10: #{tpu_custom_call.1} parent=1 // pred_check
      _
    $region11: #{tpu_custom_call.1} parent=1 // pred_check_branch
      %44 = sbr.rel (0) target = $region13
    $region12: #{tpu_custom_call.1} parent=1 // pred_region
      _
    $region13: #{tpu_custom_call.1} parent=1 // pred_fallthru
      _
    // Predicated region
    $region14: #{tpu_custom_call.1} parent=1 // pred_check
      _
    $region15: #{tpu_custom_call.1} parent=1 // pred_check_branch
      %46 = sbr.rel (0) target = $region17
    $region16: #{tpu_custom_call.1} parent=1 // pred_region
      _
    $region17: #{tpu_custom_call.1} parent=1 // pred_fallthru
      _
    // Predicated region
    $region18: #{tpu_custom_call.1} parent=1 // pred_check
      _
    $region19: #{tpu_custom_call.1} parent=1 // pred_check_branch
      %48 = sbr.rel (0) target = $region21
    $region20: #{tpu_custom_call.1} parent=1 // pred_region
      %s50 = ssub.s32 2048, 2048
      %51 = vsyncadd [#allocation6], %s50
      %s52 = sshll.u32 [#allocation7], 4
      %s53 = int_to_ptr.vmem [resolvable:$true] %s52
      %58 = dma.hbm_to_vmem [thread:$0]  %s4, 2048, %s53, [#allocation6], 128, 128, 8
    $region21: #{tpu_custom_call.1} parent=1 // pred_fallthru
      _
    // Predicated region
    $region22: #{tpu_custom_call.1} parent=1 // pred_check
      _
    $region23: #{tpu_custom_call.1} parent=1 // pred_check_branch
      %60 = sbr.rel (0) target = $region25
    $region24: #{tpu_custom_call.1} parent=1 // pred_region
      _
    $region25: #{tpu_custom_call.1} parent=1 // pred_fallthru
      _
    // Predicated region
    $region26: #{tpu_custom_call.1} parent=1 // pred_check
      _
    $region27: #{tpu_custom_call.1} parent=1 // pred_check_branch
      %62 = sbr.rel (0) target = $region29
    $region28: #{tpu_custom_call.1} parent=1 // pred_region
      _
    $region29: #{tpu_custom_call.1} parent=1 // pred_fallthru
      _
    // Predicated region
    $region30: #{tpu_custom_call.1} parent=1 // pred_check
      _
    $region31: #{tpu_custom_call.1} parent=1 // pred_check_branch
      %64 = sbr.rel (0) target = $region33
    $region32: #{tpu_custom_call.1} parent=1 // pred_region
      %s66 = ssub.s32 2048, 2048
      %67 = vsyncadd [#allocation9], %s66
      %s68 = sshll.u32 [#allocation8], 4
      %s69 = int_to_ptr.vmem [resolvable:$true] %s68
      %74 = dma.hbm_to_vmem [thread:$0]  %s7, 2048, %s69, [#allocation9], 128, 128, 8
    $region33: #{tpu_custom_call.1} parent=1 // pred_fallthru
      _
    // Predicated region
    $region34: #{tpu_custom_call.1} parent=1 // pred_check
      _
    $region35: #{tpu_custom_call.1} parent=1 // pred_check_branch
      %76 = sbr.rel (0) target = $region37
    $region36: #{tpu_custom_call.1} parent=1 // pred_region
      _
    $region37: #{tpu_custom_call.1} parent=1 // pred_fallthru
      _
    // Predicated region
    $region38: #{tpu_custom_call.1} parent=1 // pred_check
      _
    $region39: #{tpu_custom_call.1} parent=1 // pred_check_branch
      %78 = sbr.rel (0) target = $region41
    $region40: #{tpu_custom_call.1} parent=1 // pred_region
      _
    $region41: #{tpu_custom_call.1} parent=1 // pred_fallthru
      _
    // Predicated region
    $region42: #{tpu_custom_call.1} parent=1 // pred_check
      _
    $region43: #{tpu_custom_call.1} parent=1 // pred_check_branch
      %80 = sbr.rel (0) target = $region45
    $region44: #{tpu_custom_call.1} parent=1 // pred_region
      %81 = dma.done [#allocation3], 1024
    $region45: #{tpu_custom_call.1} parent=1 // pred_fallthru
      _
    // Predicated region
    $region46: #{tpu_custom_call.1} parent=1 // pred_check
      _
    $region47: #{tpu_custom_call.1} parent=1 // pred_check_branch
      %83 = sbr.rel (0) target = $region49
    $region48: #{tpu_custom_call.1} parent=1 // pred_region
      %84 = dma.done [#allocation6], 2048
    $region49: #{tpu_custom_call.1} parent=1 // pred_fallthru
      _
    // Predicated region
    $region50: #{tpu_custom_call.1} parent=1 // pred_check
      _
    $region51: #{tpu_custom_call.1} parent=1 // pred_check_branch
      %86 = sbr.rel (0) target = $region53
    $region52: #{tpu_custom_call.1} parent=1 // pred_region
      %87 = dma.done [#allocation6], 2048
    $region53: #{tpu_custom_call.1} parent=1 // pred_fallthru
      _
    // Predicated region
    $region54: #{tpu_custom_call.1} parent=1 // pred_check
      _
    $region55: #{tpu_custom_call.1} parent=1 // pred_check_branch
      %89 = sbr.rel (0) target = $region57
    $region56: #{tpu_custom_call.1} parent=1 // pred_region
      %90 = dma.done [#allocation9], 2048
    $region57: #{tpu_custom_call.1} parent=1 // pred_fallthru
      _
    %v91 = vlaneseq
    %v92 = vshrl.u32 %v91, 7
    %v93 = vadd.s32 %v92, 8
    %v94 = vadd.s32 %v92, 16
    %v95 = vadd.s32 %v92, 24
    %v96 = vadd.s32 %v92, 32
    %v97 = vadd.s32 %v92, 40
    %v98 = vadd.s32 %v92, 48
    %v99 = vadd.s32 %v92, 56
    %vm100 = vcmp.lt.s32.totalorder %v92, 60
    %vm101 = vcmp.lt.s32.totalorder %v93, 60
    %vm102 = vcmp.lt.s32.totalorder %v94, 60
    %vm103 = vcmp.lt.s32.totalorder %v95, 60
    %vm104 = vcmp.lt.s32.totalorder %v96, 60
    %vm105 = vcmp.lt.s32.totalorder %v97, 60
    %vm106 = vcmp.lt.s32.totalorder %v98, 60
    %vm107 = vcmp.lt.s32.totalorder %v99, 60
    %v108 = vld [vmem:[#allocation2] sm:$0xff]
    %v109 = vld [vmem:[#allocation2 + $0x8] sm:$0xff]
    %v110 = vld [vmem:[#allocation2 + $0x10] sm:$0xff]
    %v111 = vld [vmem:[#allocation2 + $0x18] sm:$0xff]
    %v112 = vld [vmem:[#allocation2 + $0x20] sm:$0xff]
    %v113 = vld [vmem:[#allocation2 + $0x28] sm:$0xff]
    %v114 = vld [vmem:[#allocation2 + $0x30] sm:$0xff]
    %v115 = vld [vmem:[#allocation2 + $0x38] sm:$0xff]
    %v116 = vld [vmem:[#allocation5] sm:$0xff]
    %v117 = vld [vmem:[#allocation5 + $0x8] sm:$0xff]
    %v118 = vld [vmem:[#allocation5 + $0x10] sm:$0xff]
    %v119 = vld [vmem:[#allocation5 + $0x18] sm:$0xff]
    %v120 = vld [vmem:[#allocation5 + $0x20] sm:$0xff]
    %v121 = vld [vmem:[#allocation5 + $0x28] sm:$0xff]
    %v122 = vld [vmem:[#allocation5 + $0x30] sm:$0xff]
    %v123 = vld [vmem:[#allocation5 + $0x38] sm:$0xff]
    %v124 = vld [vmem:[#allocation5 + $0x40] sm:$0xff]
    %v125 = vld [vmem:[#allocation5 + $0x48] sm:$0xff]
    %v126 = vld [vmem:[#allocation5 + $0x50] sm:$0xff]
    %v127 = vld [vmem:[#allocation5 + $0x58] sm:$0xff]
    %v128 = vld [vmem:[#allocation5 + $0x60] sm:$0xff]
    %v129 = vld [vmem:[#allocation5 + $0x68] sm:$0xff]
    %v130 = vld [vmem:[#allocation5 + $0x70] sm:$0xff]
    %v131 = vld [vmem:[#allocation5 + $0x78] sm:$0xff]
    %v132 = vld [vmem:[%s2] sm:$0x1]
    %v133 = vld [vmem:[%s3] sm:$0x1]
    %134 = vmatprep.subr.mxu0 0.0
    %135 = vmatpush1.msra.mxu0 %v131
    %136 = vmatprep.subr.mxu0 0.0
    %137 = vmatpush1.msra.mxu0 %v130
    %138 = vmatprep.subr.mxu0 0.0
    %139 = vmatpush1.msra.mxu0 %v129
    %140 = vmatprep.subr.mxu0 0.0
    %141 = vmatpush1.msra.mxu0 %v128
    %142 = vmatprep.subr.mxu0 0.0
    %143 = vmatpush1.msra.mxu0 %v127
    %144 = vmatprep.subr.mxu0 0.0
    %145 = vmatpush1.msra.mxu0 %v126
    %146 = vmatprep.subr.mxu0 0.0
    %147 = vmatpush1.msra.mxu0 %v125
    %148 = vmatprep.subr.mxu0 0.0
    %149 = vmatpush1.msra.mxu0 %v124
    %150 = vmatprep.subr.mxu0 0.0
    %151 = vmatpush1.msra.mxu0 %v123
    %152 = vmatprep.subr.mxu0 0.0
    %153 = vmatpush1.msra.mxu0 %v122
    %154 = vmatprep.subr.mxu0 0.0
    %155 = vmatpush1.msra.mxu0 %v121
    %156 = vmatprep.subr.mxu0 0.0
    %157 = vmatpush1.msra.mxu0 %v120
    %158 = vmatprep.subr.mxu0 0.0
    %159 = vmatpush1.msra.mxu0 %v119
    %160 = vmatprep.subr.mxu0 0.0
    %161 = vmatpush1.msra.mxu0 %v118
    %162 = vmatprep.subr.mxu0 0.0
    %163 = vmatpush1.msra.mxu0 %v117
    %164 = vmatprep.subr.mxu0 0.0
    %165 = vmatpush1.msra.mxu0 %v116
    %166 = vmatprep.subr.mxu0 0.0
    %167 = vmatpush2.msra.mxu0 0.0
    %168 = vmatprep.subr.mxu0 0.0
    %169 = vmatpush2.msra.mxu0 0.0
    %170 = vmatprep.subr.mxu0 0.0
    %171 = vmatpush2.msra.mxu0 0.0
    %172 = vmatprep.subr.mxu0 0.0
    %173 = vmatpush2.msra.mxu0 0.0
    %174 = vmatprep.subr.mxu0 0.0
    %175 = vmatpush2.msra.mxu0 0.0
    %176 = vmatprep.subr.mxu0 0.0
    %177 = vmatpush2.msra.mxu0 0.0
    %178 = vmatprep.subr.mxu0 0.0
    %179 = vmatpush2.msra.mxu0 0.0
    %180 = vmatprep.subr.mxu0 0.0
    %181 = vmatpush2.msra.mxu0 0.0
    %182 = vmatprep.subr.mxu0 0.0
    %183 = vmatpush2.msra.mxu0 0.0
    %184 = vmatprep.subr.mxu0 0.0
    %185 = vmatpush2.msra.mxu0 0.0
    %186 = vmatprep.subr.mxu0 0.0
    %187 = vmatpush2.msra.mxu0 0.0
    %188 = vmatprep.subr.mxu0 0.0
    %189 = vmatpush2.msra.mxu0 0.0
    %190 = vmatprep.subr.mxu0 0.0
    %191 = vmatpush2.msra.mxu0 0.0
    %192 = vmatprep.subr.mxu0 0.0
    %193 = vmatpush2.msra.mxu0 0.0
    %194 = vmatprep.subr.mxu0 0.0
    %195 = vmatpush2.msra.mxu0 0.0
    %196 = vmatprep.subr.mxu0 0.0
    %197 = vmatpush2.msra.mxu0 0.0
    %198 = vmatprep.mubr.f32.mxu0 0.0
    %199 = vmatmul.mubr.f32.gmra.mxu0 %v108
    %v200 = vpop.f32.mrf.mxu0
    %v201 = vadd.f32 0.0, %v200
    %v202 = vpop.f32.mrf.mxu0
    %203 = vmatprep.mubr.f32.mxu0 0.0
    %204 = vmatmul.mubr.f32.gmra.mxu0 %v109
    %v205 = vpop.f32.mrf.mxu0
    %v206 = vadd.f32 0.0, %v205
    %v207 = vpop.f32.mrf.mxu0
    %208 = vmatprep.mubr.f32.mxu0 0.0
    %209 = vmatmul.mubr.f32.gmra.mxu0 %v110
    %v210 = vpop.f32.mrf.mxu0
    %v211 = vadd.f32 0.0, %v210
    %v212 = vpop.f32.mrf.mxu0
    %213 = vmatprep.mubr.f32.mxu0 0.0
    %214 = vmatmul.mubr.f32.gmra.mxu0 %v111
    %v215 = vpop.f32.mrf.mxu0
    %v216 = vadd.f32 0.0, %v215
    %v217 = vpop.f32.mrf.mxu0
    %218 = vmatprep.mubr.f32.mxu0 0.0
    %219 = vmatmul.mubr.f32.gmra.mxu0 %v112
    %v220 = vpop.f32.mrf.mxu0
    %v221 = vadd.f32 0.0, %v220
    %v222 = vpop.f32.mrf.mxu0
    %223 = vmatprep.mubr.f32.mxu0 0.0
    %224 = vmatmul.mubr.f32.gmra.mxu0 %v113
    %v225 = vpop.f32.mrf.mxu0
    %v226 = vadd.f32 0.0, %v225
    %v227 = vpop.f32.mrf.mxu0
    %228 = vmatprep.mubr.f32.mxu0 0.0
    %229 = vmatmul.mubr.f32.gmra.mxu0 %v114
    %v230 = vpop.f32.mrf.mxu0
    %v231 = vadd.f32 0.0, %v230
    %v232 = vpop.f32.mrf.mxu0
    %233 = vmatprep.mubr.f32.mxu0 0.0
    %234 = vmatmul.mubr.f32.gmra.mxu0 %v115
    %v235 = vpop.f32.mrf.mxu0
    %v236 = vadd.f32 0.0, %v235
    %v237 = vpop.f32.mrf.mxu0
    %238 = vdwg.mxu0
    %v239 = vsel %vm100, 1, 0
    %v240 = vsel %vm101, 1, 0
    %v241 = vsel %vm102, 1, 0
    %v242 = vsel %vm103, 1, 0
    %v243 = vsel %vm104, 1, 0
    %v244 = vsel %vm105, 1, 0
    %v245 = vsel %vm106, 1, 0
    %v246 = vsel %vm107, 1, 0
    %vm247 = vcmp.eq.s32.totalorder %v239, 1
    %vm248 = vcmp.eq.s32.totalorder %v240, 1
    %vm249 = vcmp.eq.s32.totalorder %v241, 1
    %vm250 = vcmp.eq.s32.totalorder %v242, 1
    %vm251 = vcmp.eq.s32.totalorder %v243, 1
    %vm252 = vcmp.eq.s32.totalorder %v244, 1
    %vm253 = vcmp.eq.s32.totalorder %v245, 1
    %vm254 = vcmp.eq.s32.totalorder %v246, 1
    %v255 = vsel %vm247, %v201, 0.0
    %v256 = vsel %vm248, %v206, 0.0
    %v257 = vsel %vm249, %v211, 0.0
    %v258 = vsel %vm250, %v216, 0.0
    %v259 = vsel %vm251, %v221, 0.0
    %v260 = vsel %vm252, %v226, 0.0
    %v261 = vsel %vm253, %v231, 0.0
    %v262 = vsel %vm254, %v236, 0.0
    %v263 = vadd.f32 %v255, %v256
    %v264 = vadd.f32 %v263, %v257
    %v265 = vadd.f32 %v264, %v258
    %v266 = vadd.f32 %v265, %v259
    %v267 = vadd.f32 %v266, %v260
    %v268 = vadd.f32 %v267, %v261
    %v269 = vadd.f32 %v268, %v262
    %v270 = vrot.slane %v269, 4
    %v271 = vadd.f32 %v269, %v270
    %v272 = vrot.slane %v271, 2
    %v273 = vadd.f32 %v271, %v272
    %v274 = vrot.slane %v273, 1
    %v275 = vadd.f32 %v273, %v274
    %v276 = vmul.f32 %v255, %v255
    %v277 = vmul.f32 %v256, %v256
    %v278 = vmul.f32 %v257, %v257
    %v279 = vmul.f32 %v258, %v258
    %v280 = vmul.f32 %v259, %v259
    %v281 = vmul.f32 %v260, %v260
    %v282 = vmul.f32 %v261, %v261
    %v283 = vmul.f32 %v262, %v262
    %v284 = vadd.f32 %v276, %v277
    %v285 = vadd.f32 %v284, %v278
    %v286 = vadd.f32 %v285, %v279
    %v287 = vadd.f32 %v286, %v280
    %v288 = vadd.f32 %v287, %v281
    %v289 = vadd.f32 %v288, %v282
    %v290 = vadd.f32 %v289, %v283
    %v291 = vrot.slane %v290, 4
    %v292 = vadd.f32 %v290, %v291
    %v293 = vrot.slane %v292, 2
    %v294 = vadd.f32 %v292, %v293
    %v295 = vrot.slane %v294, 1
    %v296 = vadd.f32 %v294, %v295
    %v297 = vmul.f32 %v275, 0.016666668
    %v298 = vmul.f32 %v296, 0.016666668
    %v299 = vmul.f32 %v297, %v297
    %v300 = vsub.f32 %v298, %v299
    %v301 = vmax.f32 %v300, 0.0
    %v302 = vadd.f32 %v301, 1e-05
    %v303 = vrsqrt.pop %v302
    %v304 = vmul.f32 %v132, %v303
    %v305 = vmul.f32 %v297, %v304
    %v306 = vsub.f32 %v133, %v305
    %v308 = vlaneseq
    %v309 = vshrl.u32 %v308, 7
    %v310 = vsub.s32 0, %v309
    %v311 = vrot.slane %v304, %v310
    %v313 = vmul.f32 %v201, %v311
    %v314 = vmul.f32 %v206, %v311
    %v315 = vmul.f32 %v211, %v311
    %v316 = vmul.f32 %v216, %v311
    %v317 = vmul.f32 %v221, %v311
    %v318 = vmul.f32 %v226, %v311
    %v319 = vmul.f32 %v231, %v311
    %v320 = vmul.f32 %v236, %v311
    %v322 = vlaneseq
    %v323 = vshrl.u32 %v322, 7
    %v324 = vsub.s32 0, %v323
    %v325 = vrot.slane %v306, %v324
    %v327 = vadd.f32 %v313, %v325
    %v328 = vadd.f32 %v314, %v325
    %v329 = vadd.f32 %v315, %v325
    %v330 = vadd.f32 %v316, %v325
    %v331 = vadd.f32 %v317, %v325
    %v332 = vadd.f32 %v318, %v325
    %v333 = vadd.f32 %v319, %v325
    %v334 = vadd.f32 %v320, %v325
    %v335 = vmax.f32 %v327, 0.0
    %v336 = vmax.f32 %v328, 0.0
    %v337 = vmax.f32 %v329, 0.0
    %v338 = vmax.f32 %v330, 0.0
    %v339 = vmax.f32 %v331, 0.0
    %v340 = vmax.f32 %v332, 0.0
    %v341 = vmax.f32 %v333, 0.0
    %v342 = vmax.f32 %v334, 0.0
    %v343 = vld [vmem:[#allocation7] sm:$0xff]
    %v344 = vld [vmem:[#allocation7 + $0x8] sm:$0xff]
    %v345 = vld [vmem:[#allocation7 + $0x10] sm:$0xff]
    %v346 = vld [vmem:[#allocation7 + $0x18] sm:$0xff]
    %v347 = vld [vmem:[#allocation7 + $0x20] sm:$0xff]
    %v348 = vld [vmem:[#allocation7 + $0x28] sm:$0xff]
    %v349 = vld [vmem:[#allocation7 + $0x30] sm:$0xff]
    %v350 = vld [vmem:[#allocation7 + $0x38] sm:$0xff]
    %v351 = vld [vmem:[#allocation7 + $0x40] sm:$0xff]
    %v352 = vld [vmem:[#allocation7 + $0x48] sm:$0xff]
    %v353 = vld [vmem:[#allocation7 + $0x50] sm:$0xff]
    %v354 = vld [vmem:[#allocation7 + $0x58] sm:$0xff]
    %v355 = vld [vmem:[#allocation7 + $0x60] sm:$0xff]
    %v356 = vld [vmem:[#allocation7 + $0x68] sm:$0xff]
    %v357 = vld [vmem:[#allocation7 + $0x70] sm:$0xff]
    %v358 = vld [vmem:[#allocation7 + $0x78] sm:$0xff]
    %v359 = vld [vmem:[%s5] sm:$0x1]
    %v360 = vld [vmem:[%s6] sm:$0x1]
    %361 = vmatprep.subr.mxu0 0.0
    %362 = vmatpush1.msra.mxu0 %v358
    %363 = vmatprep.subr.mxu0 0.0
    %364 = vmatpush1.msra.mxu0 %v357
    %365 = vmatprep.subr.mxu0 0.0
    %366 = vmatpush1.msra.mxu0 %v356
    %367 = vmatprep.subr.mxu0 0.0
    %368 = vmatpush1.msra.mxu0 %v355
    %369 = vmatprep.subr.mxu0 0.0
    %370 = vmatpush1.msra.mxu0 %v354
    %371 = vmatprep.subr.mxu0 0.0
    %372 = vmatpush1.msra.mxu0 %v353
    %373 = vmatprep.subr.mxu0 0.0
    %374 = vmatpush1.msra.mxu0 %v352
    %375 = vmatprep.subr.mxu0 0.0
    %376 = vmatpush1.msra.mxu0 %v351
    %377 = vmatprep.subr.mxu0 0.0
    %378 = vmatpush1.msra.mxu0 %v350
    %379 = vmatprep.subr.mxu0 0.0
    %380 = vmatpush1.msra.mxu0 %v349
    %381 = vmatprep.subr.mxu0 0.0
    %382 = vmatpush1.msra.mxu0 %v348
    %383 = vmatprep.subr.mxu0 0.0
    %384 = vmatpush1.msra.mxu0 %v347
    %385 = vmatprep.subr.mxu0 0.0
    %386 = vmatpush1.msra.mxu0 %v346
    %387 = vmatprep.subr.mxu0 0.0
    %388 = vmatpush1.msra.mxu0 %v345
    %389 = vmatprep.subr.mxu0 0.0
    %390 = vmatpush1.msra.mxu0 %v344
    %391 = vmatprep.subr.mxu0 0.0
    %392 = vmatpush1.msra.mxu0 %v343
    %393 = vmatprep.subr.mxu0 0.0
    %394 = vmatpush2.msra.mxu0 0.0
    %395 = vmatprep.subr.mxu0 0.0
    %396 = vmatpush2.msra.mxu0 0.0
    %397 = vmatprep.subr.mxu0 0.0
    %398 = vmatpush2.msra.mxu0 0.0
    %399 = vmatprep.subr.mxu0 0.0
    %400 = vmatpush2.msra.mxu0 0.0
    %401 = vmatprep.subr.mxu0 0.0
    %402 = vmatpush2.msra.mxu0 0.0
    %403 = vmatprep.subr.mxu0 0.0
    %404 = vmatpush2.msra.mxu0 0.0
    %405 = vmatprep.subr.mxu0 0.0
    %406 = vmatpush2.msra.mxu0 0.0
    %407 = vmatprep.subr.mxu0 0.0
    %408 = vmatpush2.msra.mxu0 0.0
    %409 = vmatprep.subr.mxu0 0.0
    %410 = vmatpush2.msra.mxu0 0.0
    %411 = vmatprep.subr.mxu0 0.0
    %412 = vmatpush2.msra.mxu0 0.0
    %413 = vmatprep.subr.mxu0 0.0
    %414 = vmatpush2.msra.mxu0 0.0
    %415 = vmatprep.subr.mxu0 0.0
    %416 = vmatpush2.msra.mxu0 0.0
    %417 = vmatprep.subr.mxu0 0.0
    %418 = vmatpush2.msra.mxu0 0.0
    %419 = vmatprep.subr.mxu0 0.0
    %420 = vmatpush2.msra.mxu0 0.0
    %421 = vmatprep.subr.mxu0 0.0
    %422 = vmatpush2.msra.mxu0 0.0
    %423 = vmatprep.subr.mxu0 0.0
    %424 = vmatpush2.msra.mxu0 0.0
    %425 = vmatprep.mubr.f32.mxu0 0.0
    %426 = vmatmul.mubr.f32.gmra.mxu0 %v335
    %v427 = vpop.f32.mrf.mxu0
    %v428 = vadd.f32 0.0, %v427
    %v429 = vpop.f32.mrf.mxu0
    %430 = vmatprep.mubr.f32.mxu0 0.0
    %431 = vmatmul.mubr.f32.gmra.mxu0 %v336
    %v432 = vpop.f32.mrf.mxu0
    %v433 = vadd.f32 0.0, %v432
    %v434 = vpop.f32.mrf.mxu0
    %435 = vmatprep.mubr.f32.mxu0 0.0
    %436 = vmatmul.mubr.f32.gmra.mxu0 %v337
    %v437 = vpop.f32.mrf.mxu0
    %v438 = vadd.f32 0.0, %v437
    %v439 = vpop.f32.mrf.mxu0
    %440 = vmatprep.mubr.f32.mxu0 0.0
    %441 = vmatmul.mubr.f32.gmra.mxu0 %v338
    %v442 = vpop.f32.mrf.mxu0
    %v443 = vadd.f32 0.0, %v442
    %v444 = vpop.f32.mrf.mxu0
    %445 = vmatprep.mubr.f32.mxu0 0.0
    %446 = vmatmul.mubr.f32.gmra.mxu0 %v339
    %v447 = vpop.f32.mrf.mxu0
    %v448 = vadd.f32 0.0, %v447
    %v449 = vpop.f32.mrf.mxu0
    %450 = vmatprep.mubr.f32.mxu0 0.0
    %451 = vmatmul.mubr.f32.gmra.mxu0 %v340
    %v452 = vpop.f32.mrf.mxu0
    %v453 = vadd.f32 0.0, %v452
    %v454 = vpop.f32.mrf.mxu0
    %455 = vmatprep.mubr.f32.mxu0 0.0
    %456 = vmatmul.mubr.f32.gmra.mxu0 %v341
    %v457 = vpop.f32.mrf.mxu0
    %v458 = vadd.f32 0.0, %v457
    %v459 = vpop.f32.mrf.mxu0
    %460 = vmatprep.mubr.f32.mxu0 0.0
    %461 = vmatmul.mubr.f32.gmra.mxu0 %v342
    %v462 = vpop.f32.mrf.mxu0
    %v463 = vadd.f32 0.0, %v462
    %v464 = vpop.f32.mrf.mxu0
    %465 = vdwg.mxu0
    %v466 = vsel %vm247, %v428, 0.0
    %v467 = vsel %vm248, %v433, 0.0
    %v468 = vsel %vm249, %v438, 0.0
    %v469 = vsel %vm250, %v443, 0.0
    %v470 = vsel %vm251, %v448, 0.0
    %v471 = vsel %vm252, %v453, 0.0
    %v472 = vsel %vm253, %v458, 0.0
    %v473 = vsel %vm254, %v463, 0.0
    %v474 = vadd.f32 %v466, %v467
    %v475 = vadd.f32 %v474, %v468
    %v476 = vadd.f32 %v475, %v469
    %v477 = vadd.f32 %v476, %v470
    %v478 = vadd.f32 %v477, %v471
    %v479 = vadd.f32 %v478, %v472
    %v480 = vadd.f32 %v479, %v473
    %v481 = vrot.slane %v480, 4
    %v482 = vadd.f32 %v480, %v481
    %v483 = vrot.slane %v482, 2
    %v484 = vadd.f32 %v482, %v483
    %v485 = vrot.slane %v484, 1
    %v486 = vadd.f32 %v484, %v485
    %v487 = vmul.f32 %v466, %v466
    %v488 = vmul.f32 %v467, %v467
    %v489 = vmul.f32 %v468, %v468
    %v490 = vmul.f32 %v469, %v469
    %v491 = vmul.f32 %v470, %v470
    %v492 = vmul.f32 %v471, %v471
    %v493 = vmul.f32 %v472, %v472
    %v494 = vmul.f32 %v473, %v473
    %v495 = vadd.f32 %v487, %v488
    %v496 = vadd.f32 %v495, %v489
    %v497 = vadd.f32 %v496, %v490
    %v498 = vadd.f32 %v497, %v491
    %v499 = vadd.f32 %v498, %v492
    %v500 = vadd.f32 %v499, %v493
    %v501 = vadd.f32 %v500, %v494
    %v502 = vrot.slane %v501, 4
    %v503 = vadd.f32 %v501, %v502
    %v504 = vrot.slane %v503, 2
    %v505 = vadd.f32 %v503, %v504
    %v506 = vrot.slane %v505, 1
    %v507 = vadd.f32 %v505, %v506
    %v508 = vmul.f32 %v486, 0.016666668
    %v509 = vmul.f32 %v507, 0.016666668
    %v510 = vmul.f32 %v508, %v508
    %v511 = vsub.f32 %v509, %v510
    %v512 = vmax.f32 %v511, 0.0
    %v513 = vadd.f32 %v512, 1e-05
    %v514 = vrsqrt.pop %v513
    %v515 = vmul.f32 %v359, %v514
    %v516 = vmul.f32 %v508, %v515
    %v517 = vsub.f32 %v360, %v516
    %v519 = vlaneseq
    %v520 = vshrl.u32 %v519, 7
    %v521 = vsub.s32 0, %v520
    %v522 = vrot.slane %v515, %v521
    %v524 = vmul.f32 %v428, %v522
    %v525 = vmul.f32 %v433, %v522
    %v526 = vmul.f32 %v438, %v522
    %v527 = vmul.f32 %v443, %v522
    %v528 = vmul.f32 %v448, %v522
    %v529 = vmul.f32 %v453, %v522
    %v530 = vmul.f32 %v458, %v522
    %v531 = vmul.f32 %v463, %v522
    %v533 = vlaneseq
    %v534 = vshrl.u32 %v533, 7
    %v535 = vsub.s32 0, %v534
    %v536 = vrot.slane %v517, %v535
    %v538 = vadd.f32 %v524, %v536
    %v539 = vadd.f32 %v525, %v536
    %v540 = vadd.f32 %v526, %v536
    %v541 = vadd.f32 %v527, %v536
    %v542 = vadd.f32 %v528, %v536
    %v543 = vadd.f32 %v529, %v536
    %v544 = vadd.f32 %v530, %v536
    %v545 = vadd.f32 %v531, %v536
    %v546 = vmax.f32 %v538, 0.0
    %v547 = vmax.f32 %v539, 0.0
    %v548 = vmax.f32 %v540, 0.0
    %v549 = vmax.f32 %v541, 0.0
    %v550 = vmax.f32 %v542, 0.0
    %v551 = vmax.f32 %v543, 0.0
    %v552 = vmax.f32 %v544, 0.0
    %v553 = vmax.f32 %v545, 0.0
    %v554 = vadd.f32 %v546, %v335
    %v555 = vadd.f32 %v547, %v336
    %v556 = vadd.f32 %v548, %v337
    %v557 = vadd.f32 %v549, %v338
    %v558 = vadd.f32 %v550, %v339
    %v559 = vadd.f32 %v551, %v340
    %v560 = vadd.f32 %v552, %v341
    %v561 = vadd.f32 %v553, %v342
    %v562 = vld [vmem:[#allocation8] sm:$0xff]
    %v563 = vld [vmem:[#allocation8 + $0x8] sm:$0xff]
    %v564 = vld [vmem:[#allocation8 + $0x10] sm:$0xff]
    %v565 = vld [vmem:[#allocation8 + $0x18] sm:$0xff]
    %v566 = vld [vmem:[#allocation8 + $0x20] sm:$0xff]
    %v567 = vld [vmem:[#allocation8 + $0x28] sm:$0xff]
    %v568 = vld [vmem:[#allocation8 + $0x30] sm:$0xff]
    %v569 = vld [vmem:[#allocation8 + $0x38] sm:$0xff]
    %v570 = vld [vmem:[#allocation8 + $0x40] sm:$0xff]
    %v571 = vld [vmem:[#allocation8 + $0x48] sm:$0xff]
    %v572 = vld [vmem:[#allocation8 + $0x50] sm:$0xff]
    %v573 = vld [vmem:[#allocation8 + $0x58] sm:$0xff]
    %v574 = vld [vmem:[#allocation8 + $0x60] sm:$0xff]
    %v575 = vld [vmem:[#allocation8 + $0x68] sm:$0xff]
    %v576 = vld [vmem:[#allocation8 + $0x70] sm:$0xff]
    %v577 = vld [vmem:[#allocation8 + $0x78] sm:$0xff]
    %v578 = vld [vmem:[%s8] sm:$0x1]
    %v579 = vld [vmem:[%s9] sm:$0x1]
    %580 = vmatprep.subr.mxu0 0.0
    %581 = vmatpush1.msra.mxu0 %v577
    %582 = vmatprep.subr.mxu0 0.0
    %583 = vmatpush1.msra.mxu0 %v576
    %584 = vmatprep.subr.mxu0 0.0
    %585 = vmatpush1.msra.mxu0 %v575
    %586 = vmatprep.subr.mxu0 0.0
    %587 = vmatpush1.msra.mxu0 %v574
    %588 = vmatprep.subr.mxu0 0.0
    %589 = vmatpush1.msra.mxu0 %v573
    %590 = vmatprep.subr.mxu0 0.0
    %591 = vmatpush1.msra.mxu0 %v572
    %592 = vmatprep.subr.mxu0 0.0
    %593 = vmatpush1.msra.mxu0 %v571
    %594 = vmatprep.subr.mxu0 0.0
    %595 = vmatpush1.msra.mxu0 %v570
    %596 = vmatprep.subr.mxu0 0.0
    %597 = vmatpush1.msra.mxu0 %v569
    %598 = vmatprep.subr.mxu0 0.0
    %599 = vmatpush1.msra.mxu0 %v568
    %600 = vmatprep.subr.mxu0 0.0
    %601 = vmatpush1.msra.mxu0 %v567
    %602 = vmatprep.subr.mxu0 0.0
    %603 = vmatpush1.msra.mxu0 %v566
    %604 = vmatprep.subr.mxu0 0.0
    %605 = vmatpush1.msra.mxu0 %v565
    %606 = vmatprep.subr.mxu0 0.0
    %607 = vmatpush1.msra.mxu0 %v564
    %608 = vmatprep.subr.mxu0 0.0
    %609 = vmatpush1.msra.mxu0 %v563
    %610 = vmatprep.subr.mxu0 0.0
    %611 = vmatpush1.msra.mxu0 %v562
    %612 = vmatprep.subr.mxu0 0.0
    %613 = vmatpush2.msra.mxu0 0.0
    %614 = vmatprep.subr.mxu0 0.0
    %615 = vmatpush2.msra.mxu0 0.0
    %616 = vmatprep.subr.mxu0 0.0
    %617 = vmatpush2.msra.mxu0 0.0
    %618 = vmatprep.subr.mxu0 0.0
    %619 = vmatpush2.msra.mxu0 0.0
    %620 = vmatprep.subr.mxu0 0.0
    %621 = vmatpush2.msra.mxu0 0.0
    %622 = vmatprep.subr.mxu0 0.0
    %623 = vmatpush2.msra.mxu0 0.0
    %624 = vmatprep.subr.mxu0 0.0
    %625 = vmatpush2.msra.mxu0 0.0
    %626 = vmatprep.subr.mxu0 0.0
    %627 = vmatpush2.msra.mxu0 0.0
    %628 = vmatprep.subr.mxu0 0.0
    %629 = vmatpush2.msra.mxu0 0.0
    %630 = vmatprep.subr.mxu0 0.0
    %631 = vmatpush2.msra.mxu0 0.0
    %632 = vmatprep.subr.mxu0 0.0
    %633 = vmatpush2.msra.mxu0 0.0
    %634 = vmatprep.subr.mxu0 0.0
    %635 = vmatpush2.msra.mxu0 0.0
    %636 = vmatprep.subr.mxu0 0.0
    %637 = vmatpush2.msra.mxu0 0.0
    %638 = vmatprep.subr.mxu0 0.0
    %639 = vmatpush2.msra.mxu0 0.0
    %640 = vmatprep.subr.mxu0 0.0
    %641 = vmatpush2.msra.mxu0 0.0
    %642 = vmatprep.subr.mxu0 0.0
    %643 = vmatpush2.msra.mxu0 0.0
    %644 = vmatprep.mubr.f32.mxu0 0.0
    %645 = vmatmul.mubr.f32.gmra.mxu0 %v554
    %v646 = vpop.f32.mrf.mxu0
    %v647 = vadd.f32 0.0, %v646
    %v648 = vpop.f32.mrf.mxu0
    %649 = vmatprep.mubr.f32.mxu0 0.0
    %650 = vmatmul.mubr.f32.gmra.mxu0 %v555
    %v651 = vpop.f32.mrf.mxu0
    %v652 = vadd.f32 0.0, %v651
    %v653 = vpop.f32.mrf.mxu0
    %654 = vmatprep.mubr.f32.mxu0 0.0
    %655 = vmatmul.mubr.f32.gmra.mxu0 %v556
    %v656 = vpop.f32.mrf.mxu0
    %v657 = vadd.f32 0.0, %v656
    %v658 = vpop.f32.mrf.mxu0
    %659 = vmatprep.mubr.f32.mxu0 0.0
    %660 = vmatmul.mubr.f32.gmra.mxu0 %v557
    %v661 = vpop.f32.mrf.mxu0
    %v662 = vadd.f32 0.0, %v661
    %v663 = vpop.f32.mrf.mxu0
    %664 = vmatprep.mubr.f32.mxu0 0.0
    %665 = vmatmul.mubr.f32.gmra.mxu0 %v558
    %v666 = vpop.f32.mrf.mxu0
    %v667 = vadd.f32 0.0, %v666
    %v668 = vpop.f32.mrf.mxu0
    %669 = vmatprep.mubr.f32.mxu0 0.0
    %670 = vmatmul.mubr.f32.gmra.mxu0 %v559
    %v671 = vpop.f32.mrf.mxu0
    %v672 = vadd.f32 0.0, %v671
    %v673 = vpop.f32.mrf.mxu0
    %674 = vmatprep.mubr.f32.mxu0 0.0
    %675 = vmatmul.mubr.f32.gmra.mxu0 %v560
    %v676 = vpop.f32.mrf.mxu0
    %v677 = vadd.f32 0.0, %v676
    %v678 = vpop.f32.mrf.mxu0
    %679 = vmatprep.mubr.f32.mxu0 0.0
    %680 = vmatmul.mubr.f32.gmra.mxu0 %v561
    %v681 = vpop.f32.mrf.mxu0
    %v682 = vadd.f32 0.0, %v681
    %v683 = vpop.f32.mrf.mxu0
    %684 = vdwg.mxu0
    %v685 = vsel %vm247, %v647, 0.0
    %v686 = vsel %vm248, %v652, 0.0
    %v687 = vsel %vm249, %v657, 0.0
    %v688 = vsel %vm250, %v662, 0.0
    %v689 = vsel %vm251, %v667, 0.0
    %v690 = vsel %vm252, %v672, 0.0
    %v691 = vsel %vm253, %v677, 0.0
    %v692 = vsel %vm254, %v682, 0.0
    %v693 = vadd.f32 %v685, %v686
    %v694 = vadd.f32 %v693, %v687
    %v695 = vadd.f32 %v694, %v688
    %v696 = vadd.f32 %v695, %v689
    %v697 = vadd.f32 %v696, %v690
    %v698 = vadd.f32 %v697, %v691
    %v699 = vadd.f32 %v698, %v692
    %v700 = vrot.slane %v699, 4
    %v701 = vadd.f32 %v699, %v700
    %v702 = vrot.slane %v701, 2
    %v703 = vadd.f32 %v701, %v702
    %v704 = vrot.slane %v703, 1
    %v705 = vadd.f32 %v703, %v704
    %v706 = vmul.f32 %v685, %v685
    %v707 = vmul.f32 %v686, %v686
    %v708 = vmul.f32 %v687, %v687
    %v709 = vmul.f32 %v688, %v688
    %v710 = vmul.f32 %v689, %v689
    %v711 = vmul.f32 %v690, %v690
    %v712 = vmul.f32 %v691, %v691
    %v713 = vmul.f32 %v692, %v692
    %v714 = vadd.f32 %v706, %v707
    %v715 = vadd.f32 %v714, %v708
    %v716 = vadd.f32 %v715, %v709
    %v717 = vadd.f32 %v716, %v710
    %v718 = vadd.f32 %v717, %v711
    %v719 = vadd.f32 %v718, %v712
    %v720 = vadd.f32 %v719, %v713
    %v721 = vrot.slane %v720, 4
    %v722 = vadd.f32 %v720, %v721
    %v723 = vrot.slane %v722, 2
    %v724 = vadd.f32 %v722, %v723
    %v725 = vrot.slane %v724, 1
    %v726 = vadd.f32 %v724, %v725
    %v727 = vmul.f32 %v705, 0.016666668
    %v728 = vmul.f32 %v726, 0.016666668
    %v729 = vmul.f32 %v727, %v727
    %v730 = vsub.f32 %v728, %v729
    %v731 = vmax.f32 %v730, 0.0
    %v732 = vadd.f32 %v731, 1e-05
    %v733 = vrsqrt.pop %v732
    %v734 = vmul.f32 %v578, %v733
    %v735 = vmul.f32 %v727, %v734
    %v736 = vsub.f32 %v579, %v735
    %v738 = vlaneseq
    %v739 = vshrl.u32 %v738, 7
    %v740 = vsub.s32 0, %v739
    %v741 = vrot.slane %v734, %v740
    %v743 = vmul.f32 %v647, %v741
    %v744 = vmul.f32 %v652, %v741
    %v745 = vmul.f32 %v657, %v741
    %v746 = vmul.f32 %v662, %v741
    %v747 = vmul.f32 %v667, %v741
    %v748 = vmul.f32 %v672, %v741
    %v749 = vmul.f32 %v677, %v741
    %v750 = vmul.f32 %v682, %v741
    %v752 = vlaneseq
    %v753 = vshrl.u32 %v752, 7
    %v754 = vsub.s32 0, %v753
    %v755 = vrot.slane %v736, %v754
    %v757 = vadd.f32 %v743, %v755
    %v758 = vadd.f32 %v744, %v755
    %v759 = vadd.f32 %v745, %v755
    %v760 = vadd.f32 %v746, %v755
    %v761 = vadd.f32 %v747, %v755
    %v762 = vadd.f32 %v748, %v755
    %v763 = vadd.f32 %v749, %v755
    %v764 = vadd.f32 %v750, %v755
    %v765 = vtanh.pop %v757
    %v766 = vtanh.pop %v758
    %v767 = vtanh.pop %v759
    %v768 = vtanh.pop %v760
    %v769 = vtanh.pop %v761
    %v770 = vtanh.pop %v762
    %v771 = vtanh.pop %v763
    %v772 = vtanh.pop %v764
    %v773 = vadd.f32 %v765, %v554
    %v774 = vadd.f32 %v766, %v555
    %v775 = vadd.f32 %v767, %v556
    %v776 = vadd.f32 %v768, %v557
    %v777 = vadd.f32 %v769, %v558
    %v778 = vadd.f32 %v770, %v559
    %v779 = vadd.f32 %v771, %v560
    %v780 = vadd.f32 %v772, %v561
    %781 = vst [vmem:[#allocation10] sm:$0xff] %v773
    %782 = vst [vmem:[#allocation10 + $0x8] sm:$0xff] %v774
    %783 = vst [vmem:[#allocation10 + $0x10] sm:$0xff] %v775
    %784 = vst [vmem:[#allocation10 + $0x18] sm:$0xff] %v776
    %785 = vst [vmem:[#allocation10 + $0x20] sm:$0xff] %v777
    %786 = vst [vmem:[#allocation10 + $0x28] sm:$0xff] %v778
    %787 = vst [vmem:[#allocation10 + $0x30] sm:$0xff] %v779
    %788 = vst [vmem:[#allocation10 + $0x38] sm:$0xff] %v780
    // Predicated region
    $region58: #{tpu_custom_call.1} parent=1 // pred_check
      _
    $region59: #{tpu_custom_call.1} parent=1 // pred_check_branch
      %790 = sbr.rel (0) target = $region61
    $region60: #{tpu_custom_call.1} parent=1 // pred_region
      %s792 = ssub.s32 1024, 1024
      %793 = vsyncadd [#allocation4], %s792
      %s794 = sshll.u32 [#allocation10], 4
      %s795 = int_to_ptr.vmem [resolvable:$true] %s794
      %800 = dma.vmem_to_hbm [thread:$0]  %s795, 1024, %s10, [#allocation4], 128, 128, 8
    $region61: #{tpu_custom_call.1} parent=1 // pred_fallthru
      _
    // Predicated region
    $region62: #{tpu_custom_call.1} parent=1 // pred_check
      _
    $region63: #{tpu_custom_call.1} parent=1 // pred_check_branch
      %802 = sbr.rel (0) target = $region65
    $region64: #{tpu_custom_call.1} parent=1 // pred_region
      %803 = dma.done [#allocation4], 1024
    $region65: #{tpu_custom_call.1} parent=1 // pred_fallthru
      _
    %804 = vsyncpa [#allocation3], 1
    %805 = vsyncpa [#allocation6], 1
    %806 = vsyncpa [#allocation9], 1
    %807 = vsyncpa [#allocation4], 1

</llo_original>
